<compile_context>
chip_gen: v5e
topology: v5e:2x2
jax: 0.10.0
libtpu: 0.0.40
codegen_flags: <defaults>
</compile_context>

<pallas_src>
import functools
import math

import jax
import jax.numpy as jnp
from jax.experimental import pallas as pl
from jax.experimental.pallas import tpu as pltpu


# ------------------------------ VMEM budget ---------------------------------

def _vmem_limit_bytes():
    # v5e/v6e: 128 MiB per TensorCore, v7x: 64 MiB.  Leave ~25% headroom.
    try:
        cap = int(pltpu.get_tpu_info().vmem_capacity_bytes)
    except Exception:
        cap = 64 * 1024 * 1024
    return min((cap * 3) // 4, 96 * 1024 * 1024)


_VMEM_LIMIT = _vmem_limit_bytes()


def _cparams(*sem):
    return pltpu.CompilerParams(
        dimension_semantics=sem if sem else None,
        vmem_limit_bytes=_VMEM_LIMIT)


# ============================ Pallas kernels ================================

def _conv_kernel(x_ref, w_ref, b_ref, *rest, K, pad, cin_is_one,
                 chan_add, full_add):
    """1-D conv, one sample per grid step, activations in (C, L) layout.

    x_ref : (1, C_in, L)      bf16
    w_ref : (K, C_out, C_in)  bf16
    b_ref : (C_out, 1)        f32
    rest  : [emb (1, C_out, 1) f32]?  [res (1, C_out, L) bf16]?  out (1, C_out, L)
    """
    o_ref = rest[-1]
    extra = rest[:-1]

    x = x_ref[0]                                  # (C_in, L) bf16
    c_in, L = x.shape
    c_out = w_ref.shape[1]

    if pad:
        z = jnp.zeros((c_in, pad), x.dtype)
        xp = jnp.concatenate([z, x, z], axis=1)   # (C_in, L + 2*pad), VMEM only
    else:
        xp = x

    acc = jnp.zeros((c_out, L), jnp.float32)
    for k in range(K):                            # K in {1, 3, 5}: static unroll
        xs = xp[:, k:k + L]                       # shifted tap, (C_in, L)
        wk = w_ref[k]                             # (C_out, C_in) bf16
        if cin_is_one:
            # Degenerate contraction (stem conv): VPU broadcast multiply-add.
            acc = acc + wk.astype(jnp.float32) * xs.astype(jnp.float32)
        else:
            acc = acc + jnp.dot(wk, xs, preferred_element_type=jnp.float32)

    y = acc + b_ref[...]                          # bias (C_out, 1) broadcast
    i = 0
    if chan_add:                                  # fused timestep-embedding add
        y = y + extra[i][0]
        i += 1
    if full_add:                                  # fused residual add
        y = y + extra[i][0].astype(jnp.float32)
    o_ref[...] = y[None].astype(o_ref.dtype)


def _groupnorm_kernel(x_ref, g_ref, b_ref, o_ref, *, groups, eps, silu):
    """GroupNorm(32) (+ optional fused SiLU); whole sample per grid step."""
    for g in range(groups):                       # static unroll over groups
        x = x_ref[0, g].astype(jnp.float32)       # (cg, L)
        mean = jnp.mean(x)
        var = jnp.mean(jnp.square(x - mean))
        y = (x - mean) * jax.lax.rsqrt(var + eps)
        y = y * g_ref[g] + b_ref[g]               # (cg, 1) broadcast over L
        if silu:
            y = y * jax.nn.sigmoid(y)
        o_ref[0, g] = y.astype(o_ref.dtype)


def _attention_kernel(qt_ref, k_ref, vt_ref, o_ref, *, scale):
    """Single-head QKVAttentionLegacy; q/v pre-transposed to (L, C)."""
    qt = (qt_ref[0].astype(jnp.float32) * scale).astype(jnp.bfloat16)   # (L, C)
    k = (k_ref[0].astype(jnp.float32) * scale).astype(jnp.bfloat16)     # (C, L)
    logits = jnp.dot(qt, k, preferred_element_type=jnp.float32)         # (L, L)
    logits = logits - jnp.max(logits, axis=-1, keepdims=True)
    w = jnp.exp(logits)
    w = w / jnp.sum(w, axis=-1, keepdims=True)                          # f32 softmax
    out = jnp.dot(w.astype(jnp.bfloat16), vt_ref[0],
                  preferred_element_type=jnp.float32)                   # (L, C)
    o_ref[...] = out[None].astype(o_ref.dtype)


def _linear_kernel(x_ref, w_ref, b_ref, o_ref, *, act):
    y = jnp.dot(x_ref[...], w_ref[...], preferred_element_type=jnp.float32)
    y = y + b_ref[...]
    if act == "silu":
        y = y * jax.nn.sigmoid(y)
    o_ref[...] = y.astype(o_ref.dtype)


# ============================ Kernel wrappers ===============================

@functools.partial(jax.jit, static_argnames=("stride", "out_dtype"))
def conv1d(x, p, emb=None, res=None, stride=1, out_dtype=jnp.bfloat16):
    """PyTorch Conv1d semantics (NCL, padding=(K-1)//2).  Optional fused
    per-channel add (timestep embedding) and full residual add."""
    w, b = p["w"], p["b"]                          # (K, C_out, C_in) bf16, (C_out,) f32
    K, C_out, C_in = w.shape
    N, _, L = x.shape
    pad = (K - 1) // 2

    inputs = [x, w, b.astype(jnp.float32).reshape(C_out, 1)]
    in_specs = [
        pl.BlockSpec((1, C_in, L), lambda n: (n, 0, 0)),
        pl.BlockSpec((K, C_out, C_in), lambda n: (0, 0, 0)),
        pl.BlockSpec((C_out, 1), lambda n: (0, 0)),
    ]
    if emb is not None:
        inputs.append(emb.astype(jnp.float32).reshape(N, C_out, 1))
        in_specs.append(pl.BlockSpec((1, C_out, 1), lambda n: (n, 0, 0)))
    if res is not None:
        inputs.append(res)
        in_specs.append(pl.BlockSpec((1, C_out, L), lambda n: (n, 0, 0)))

    kernel = functools.partial(
        _conv_kernel, K=K, pad=pad, cin_is_one=(C_in == 1),
        chan_add=emb is not None, full_add=res is not None)

    y = pl.pallas_call(
        kernel,
        out_shape=jax.ShapeDtypeStruct((N, C_out, L), out_dtype),
        grid=(N,),
        in_specs=in_specs,
        out_specs=pl.BlockSpec((1, C_out, L), lambda n: (n, 0, 0)),
        compiler_params=_cparams("parallel"),
    )(*inputs)
    if stride > 1:
        # stride-2 downsample conv == stride-1 conv + cheap XLA decimation
        y = y[:, :, ::stride]
    return y


@functools.partial(jax.jit, static_argnames=("silu", "groups", "eps"))
def group_norm(x, gamma, beta, silu=False, groups=32, eps=1e-5):
    """GroupNorm(32, C) (+ optional fused SiLU) over (N, C, L)."""
    N, C, L = x.shape
    cg = C // groups
    x4 = x.reshape(N, groups, cg, L)
    g3 = gamma.astype(jnp.float32).reshape(groups, cg, 1)
    b3 = beta.astype(jnp.float32).reshape(groups, cg, 1)
    out = pl.pallas_call(
        functools.partial(_groupnorm_kernel, groups=groups, eps=eps, silu=silu),
        out_shape=jax.ShapeDtypeStruct((N, groups, cg, L), x.dtype),
        grid=(N,),
        in_specs=[
            pl.BlockSpec((1, groups, cg, L), lambda n: (n, 0, 0, 0)),
            pl.BlockSpec((groups, cg, 1), lambda n: (0, 0, 0)),
            pl.BlockSpec((groups, cg, 1), lambda n: (0, 0, 0)),
        ],
        out_specs=pl.BlockSpec((1, groups, cg, L), lambda n: (n, 0, 0, 0)),
        compiler_params=_cparams("parallel"),
    )(x4, g3, b3)
    return out.reshape(N, C, L)


@jax.jit
def qkv_attention(q, k, v):
    """Single-head QKVAttentionLegacy (num_heads=1)."""
    N, C, L = q.shape
    scale = 1.0 / math.sqrt(math.sqrt(C))
    qt = jnp.transpose(q, (0, 2, 1))               # tiny (L=256) relayouts
    vt = jnp.transpose(v, (0, 2, 1))
    out_t = pl.pallas_call(
        functools.partial(_attention_kernel, scale=scale),
        out_shape=jax.ShapeDtypeStruct((N, L, C), q.dtype),
        grid=(N,),
        in_specs=[
            pl.BlockSpec((1, L, C), lambda n: (n, 0, 0)),
            pl.BlockSpec((1, C, L), lambda n: (n, 0, 0)),
            pl.BlockSpec((1, L, C), lambda n: (n, 0, 0)),
        ],
        out_specs=pl.BlockSpec((1, L, C), lambda n: (n, 0, 0)),
        compiler_params=_cparams("parallel"),
    )(qt, k, vt)
    return jnp.transpose(out_t, (0, 2, 1))


@functools.partial(jax.jit, static_argnames=("act",))
def linear(x, p, act="none"):
    """y = act(x @ w + b) for the tiny timestep-embedding MLPs."""
    w, b = p["w"], p["b"]                          # (C_in, C_out) bf16, (C_out,) f32
    M, K = x.shape
    _, Nout = w.shape
    return pl.pallas_call(
        functools.partial(_linear_kernel, act=act),
        out_shape=jax.ShapeDtypeStruct((M, Nout), jnp.float32),
        grid=(1,),
        in_specs=[
            pl.BlockSpec((M, K), lambda i: (0, 0)),
            pl.BlockSpec((K, Nout), lambda i: (0, 0)),
            pl.BlockSpec((1, Nout), lambda i: (0, 0)),
        ],
        out_specs=pl.BlockSpec((M, Nout), lambda i: (0, 0)),
        compiler_params=_cparams(),
    )(x.astype(jnp.bfloat16), w, b.astype(jnp.float32).reshape(1, Nout))


# ============================ JAX glue layers ===============================

def timestep_embedding(timesteps, dim, max_period=10000):
    half = dim // 2
    freqs = jnp.exp(-math.log(max_period) *
                    jnp.arange(half, dtype=jnp.float32) / half)
    args = timesteps.astype(jnp.float32)[:, None] * freqs[None]
    emb = jnp.concatenate([jnp.cos(args), jnp.sin(args)], axis=-1)
    if dim % 2:
        emb = jnp.concatenate([emb, jnp.zeros_like(emb[:, :1])], axis=-1)
    return emb


def nearest_interp(x, size):
    # torch F.interpolate(mode='nearest'): out[i] = in[floor(i * L_in / L_out)]
    N, C, L = x.shape
    idx = (jnp.arange(size) * L) // size
    return x[:, :, idx]


# ============================ Parameter setup ===============================

class ParamGen:
    def __init__(self, key):
        self._key = key
        self._i = 0

    def _next(self):
        self._i += 1
        return jax.random.fold_in(self._key, self._i)

    def weight(self, shape, fan_in):
        return jax.random.normal(self._next(), shape, jnp.float32) / math.sqrt(fan_in)

    def bias(self, shape):
        return 0.01 * jax.random.normal(self._next(), shape, jnp.float32)


def make_conv(pg, cin, cout, k):
    # Stored in kernel-ready (K, C_out, C_in) layout, bf16 MXU operand dtype.
    return {"w": pg.weight((k, cout, cin), cin * k).astype(jnp.bfloat16),
            "b": pg.bias((cout,))}


def make_linear(pg, cin, cout):
    # Stored pre-transposed (C_in, C_out), bf16.
    return {"w": pg.weight((cin, cout), cin).astype(jnp.bfloat16),
            "b": pg.bias((cout,))}


def make_norm(c):
    return {"g": jnp.ones((c,), jnp.float32), "b": jnp.zeros((c,), jnp.float32)}


def make_resblock(pg, ch, emb_dim, out_ch, k):
    p = {
        "in_norm": make_norm(ch),
        "in_conv": make_conv(pg, ch, out_ch, k),
        "emb_lin": make_linear(pg, emb_dim, out_ch),
        "out_norm": make_norm(out_ch),
        # zero_module() in the reference zero-inits this conv; random init here
        # so the kernel path is exercised non-trivially.
        "out_conv": make_conv(pg, out_ch, out_ch, k),
    }
    if out_ch != ch:
        p["skip"] = make_conv(pg, ch, out_ch, 1)
    return p


def make_attention(pg, ch):
    return {"norm": make_norm(ch),
            "qkv": make_conv(pg, ch, 3 * ch, 1),
            "proj": make_conv(pg, ch, ch, 1)}   # zero_module in reference


def build_model(pg, cfg):
    mc = cfg["model_channels"]
    cm = cfg["channel_mult"]
    nrb = cfg["num_res_blocks"]
    attn_res = cfg["attention_resolutions"]
    scl = cfg["spectrogram_conditioning_level"]
    ks = cfg["kernel_size"]
    ted = mc * 4

    model = {"time_embed": [make_linear(pg, mc, ted), make_linear(pg, ted, ted)]}
    spec_chs = cm[scl] * mc
    model["spec_cond"] = {
        "conv1": make_conv(pg, cfg["spectrogram_channels"], spec_chs, 1),
        "norm": make_norm(spec_chs),
        "conv2": make_conv(pg, spec_chs, spec_chs, 1),
    }
    model["conv_conv"] = {"norm": make_norm(spec_chs * 2),
                          "conv": make_conv(pg, spec_chs * 2, spec_chs * 2, 1)}

    input_blocks = [[("conv", make_conv(pg, cfg["in_channels"], mc, ks))]]
    input_block_chans = [mc]
    ch = mc
    ds = 1
    injection_point = None
    for level, mult in enumerate(cm):
        if level == scl + 1:
            ch *= 2
        for _ in range(nrb):
            layers = [("res", make_resblock(pg, ch, ted, mult * mc, ks))]
            ch = mult * mc
            if ds in attn_res:
                layers.append(("attn", make_attention(pg, ch)))
            input_blocks.append(layers)
            input_block_chans.append(ch)
        if level != len(cm) - 1:
            input_blocks.append([("down", {"conv": make_conv(pg, ch, ch, 3)})])
            input_block_chans.append(ch)
            ds *= 2
        if level == scl:
            injection_point = len(input_blocks) - 1
            input_block_chans[-1] *= 2
    model["input_blocks"] = input_blocks
    model["injection_point"] = injection_point

    model["middle_block"] = [("res", make_resblock(pg, ch, ted, ch, ks)),
                             ("attn", make_attention(pg, ch)),
                             ("res", make_resblock(pg, ch, ted, ch, ks))]

    output_blocks = []
    for level, mult in list(enumerate(cm))[::-1]:
        for i in range(nrb + 1):
            ich = input_block_chans.pop()
            layers = [("res", make_resblock(pg, ch + ich, ted, mc * mult, ks))]
            ch = mc * mult
            if ds in attn_res:
                layers.append(("attn", make_attention(pg, ch)))
            if level and i == nrb:
                layers.append(("up", {"conv": make_conv(pg, ch, ch, 3)}))
                ds //= 2
            output_blocks.append(layers)
    model["output_blocks"] = output_blocks

    model["out"] = {"norm": make_norm(ch),
                    "conv": make_conv(pg, mc, cfg["out_channels"], ks)}  # zero_module in ref
    return model


# ============================ Forward pass ==================================

def apply_resblock(p, x, emb_silu):
    h = group_norm(x, p["in_norm"]["g"], p["in_norm"]["b"], silu=True)
    emb_out = linear(emb_silu, p["emb_lin"])                 # (N, C_out) f32
    h = conv1d(h, p["in_conv"], emb=emb_out)                 # bias + emb fused
    h = group_norm(h, p["out_norm"]["g"], p["out_norm"]["b"], silu=True)
    # Dropout(p=0) is the identity.
    skip = conv1d(x, p["skip"]) if "skip" in p else x
    return conv1d(h, p["out_conv"], res=skip)                # residual fused


def apply_attention(p, x):
    N, C, L = x.shape
    h = group_norm(x, p["norm"]["g"], p["norm"]["b"], silu=False)
    qkv = conv1d(h, p["qkv"])
    q, k, v = qkv[:, :C], qkv[:, C:2 * C], qkv[:, 2 * C:]
    a = qkv_attention(q, k, v)
    return conv1d(a, p["proj"], res=x)                       # residual fused


def apply_block(layers, h, emb_silu):
    for kind, p in layers:
        if kind == "conv":
            h = conv1d(h, p)
        elif kind == "res":
            h = apply_resblock(p, h, emb_silu)
        elif kind == "attn":
            h = apply_attention(p, h)
        elif kind == "down":
            h = conv1d(h, p["conv"], stride=2)
        elif kind == "up":
            h = jnp.repeat(h, 2, axis=-1)                    # nearest 2x upsample
            h = conv1d(h, p["conv"])
    return h


def diffusion_vocoder_forward(model, cfg, x, timesteps, spectrogram):
    assert x.shape[-1] % 4096 == 0
    mc = cfg["model_channels"]
    hs = []
    emb = timestep_embedding(timesteps, mc)
    emb = linear(emb, model["time_embed"][0], act="silu")
    emb = linear(emb, model["time_embed"][1])
    emb_silu = jax.nn.silu(emb)          # shared by every ResBlock emb projection

    sc = model["spec_cond"]
    cond = conv1d(spectrogram.astype(jnp.bfloat16), sc["conv1"])
    cond = group_norm(cond, sc["norm"]["g"], sc["norm"]["b"], silu=True)
    cond = conv1d(cond, sc["conv2"])

    h = x.astype(jnp.bfloat16)
    for idx, block in enumerate(model["input_blocks"]):
        h = apply_block(block, h, emb_silu)
        if idx == model["injection_point"]:
            c = nearest_interp(cond, h.shape[-1])
            h = jnp.concatenate([h, c], axis=1)
            cc = model["conv_conv"]
            h = group_norm(h, cc["norm"]["g"], cc["norm"]["b"], silu=True)
            h = conv1d(h, cc["conv"])
        hs.append(h)

    h = apply_block(model["middle_block"], h, emb_silu)

    for block in model["output_blocks"]:
        h = jnp.concatenate([h, hs.pop()], axis=1)
        h = apply_block(block, h, emb_silu)

    outp = model["out"]
    h = group_norm(h, outp["norm"]["g"], outp["norm"]["b"], silu=True)
    return conv1d(h, outp["conv"], out_dtype=jnp.float32)


# ================================ Main ======================================

if __name__ == "__main__":
    cfg = dict(
        model_channels=32,                # must be a multiple of 32 (GroupNorm32)
        num_res_blocks=1,
        in_channels=1,
        out_channels=2,
        spectrogram_channels=16,
        spectrogram_conditioning_level=3,
        channel_mult=(1, 2, 4, 8, 16),
        attention_resolutions=(16,),
        kernel_size=5,
    )
    key = jax.random.PRNGKey(0)
    pkey, xkey, skey = jax.random.split(key, 3)
    model = build_model(ParamGen(pkey), cfg)

    N = 2
    L = 4096                              # forward asserts L % 4096 == 0
    x = jax.random.normal(xkey, (N, cfg["in_channels"], L), dtype=jnp.float32)
    timesteps = jnp.array([17.0, 511.0], dtype=jnp.float32)
    spectrogram = jax.random.normal(
        skey, (N, cfg["spectrogram_channels"], 32), dtype=jnp.float32)

    y = diffusion_vocoder_forward(model, cfg, x, timesteps, spectrogram)
    y = jax.block_until_ready(y)
    assert y.shape == (N, cfg["out_channels"], L), y.shape
    assert bool(jnp.all(jnp.isfinite(y)))
    print("KERNEL_OK")
</pallas_src>

<mosaic_0001>
module attributes {stable_mosaic.version = 11 : i64} {
  func.func @_linear_kernel(%arg0: i32, %arg1: memref<2x32xbf16, #tpu.memory_space<vmem>>, %arg2: memref<32x128xbf16, #tpu.memory_space<vmem>>, %arg3: memref<1x128xf32, #tpu.memory_space<vmem>>, %arg4: memref<2x128xf32, #tpu.memory_space<vmem>>) attributes {dimension_semantics = [#tpu.dimension_semantics<arbitrary>], iteration_bounds = array<i64: 1>, scalar_prefetch = 0 : i64, scratch_operands = 0 : i64, tpu.core_type = #tpu.core_type<tc>, window_params = [{pipeline_mode = #tpu.pipeline_mode<synchronous>, transform_indices = @transform_0, window_bounds = array<i64: 2, 32>}, {pipeline_mode = #tpu.pipeline_mode<synchronous>, transform_indices = @transform_1, window_bounds = array<i64: 32, 128>}, {pipeline_mode = #tpu.pipeline_mode<synchronous>, transform_indices = @transform_2, window_bounds = array<i64: 1, 128>}, {pipeline_mode = #tpu.pipeline_mode<synchronous>, transform_indices = @transform_3, window_bounds = array<i64: 2, 128>}]} {
    %c0 = arith.constant 0 : index
    %c0_0 = arith.constant 0 : index
    %0 = vector.load %arg1[%c0, %c0_0] : memref<2x32xbf16, #tpu.memory_space<vmem>>, vector<2x32xbf16>
    %c0_1 = arith.constant 0 : index
    %c0_2 = arith.constant 0 : index
    %1 = vector.load %arg2[%c0_1, %c0_2] : memref<32x128xbf16, #tpu.memory_space<vmem>>, vector<32x128xbf16>
    %cst = arith.constant dense<0.000000e+00> : vector<2x128xf32>
    %2 = tpu.matmul %0, %1, %cst {dimension_numbers = #tpu.dot_dimension_numbers<[1], [0], [0], [1], [0, 0, 1, 1], [], []>} : vector<2x32xbf16>, vector<32x128xbf16>, vector<2x128xf32> -> vector<2x128xf32>
    %c0_3 = arith.constant 0 : index
    %c0_4 = arith.constant 0 : index
    %3 = vector.load %arg3[%c0_3, %c0_4] : memref<1x128xf32, #tpu.memory_space<vmem>>, vector<1x128xf32>
    %4 = vector.broadcast %3 : vector<1x128xf32> to vector<2x128xf32>
    %5 = arith.addf %2, %4 : vector<2x128xf32>
    %6 = arith.negf %5 : vector<2x128xf32>
    %7 = math.exp %6 : vector<2x128xf32>
    %cst_5 = arith.constant 1.000000e+00 : f32
    %8 = vector.broadcast %cst_5 : f32 to vector<2x128xf32>
    %9 = arith.addf %8, %7 : vector<2x128xf32>
    %10 = arith.divf %8, %9 : vector<2x128xf32>
    %11 = arith.mulf %5, %10 : vector<2x128xf32>
    %c0_6 = arith.constant 0 : index
    %c0_7 = arith.constant 0 : index
    %12 = vector.load %arg4[%c0_6, %c0_7] : memref<2x128xf32, #tpu.memory_space<vmem>>, vector<2x128xf32>
    tpu.vector_store %arg4[%c0_6, %c0_7], %11 {strides = array<i32>} : memref<2x128xf32, #tpu.memory_space<vmem>>, vector<2x128xf32>,
    return
  }
  func.func @transform_0(%arg0: i32) -> (i32, i32) {
    %c0_i32 = arith.constant 0 : i32
    %c0_i32_0 = arith.constant 0 : i32
    %c0_i32_1 = arith.constant 0 : i32
    return %c0_i32, %c0_i32_0 : i32, i32
  }
  func.func @transform_1(%arg0: i32) -> (i32, i32) {
    %c0_i32 = arith.constant 0 : i32
    %c0_i32_0 = arith.constant 0 : i32
    %c0_i32_1 = arith.constant 0 : i32
    return %c0_i32, %c0_i32_0 : i32, i32
  }
  func.func @transform_2(%arg0: i32) -> (i32, i32) {
    %c0_i32 = arith.constant 0 : i32
    %c0_i32_0 = arith.constant 0 : i32
    %c0_i32_1 = arith.constant 0 : i32
    return %c0_i32, %c0_i32_0 : i32, i32
  }
  func.func @transform_3(%arg0: i32) -> (i32, i32) {
    %c0_i32 = arith.constant 0 : i32
    %c0_i32_0 = arith.constant 0 : i32
    %c0_i32_1 = arith.constant 0 : i32
    return %c0_i32, %c0_i32_0 : i32, i32
  }
}

</mosaic_0001>

<llo_original>
// kernel: linear.1
$region0: #{linear.1}
  #allocation0 [shape = 'u32[]', space=smem, size = 0x4, offset = 0x4, fixed_abs, tag = 'smem constant byte address 0x4 - core index']
  #allocation1 [shape = 'u32[72,128]{1,0:T(1,128)}', space=vmem, size = 0x9000, scoped, tag = 'internal scratch']
  %s0 = inlined_call_operand.vmem [shape: bf16[2,32], index: 0, kind: input, shape index: {}]
  %s1 = inlined_call_operand.hbm [shape: bf16[32,128], index: 1, kind: input, shape index: {}]
  %s2 = inlined_call_operand.vmem [shape: f32[1,128], index: 2, kind: input, shape index: {}]
  %s3 = inlined_call_operand.hbm [shape: f32[2,128], index: 3, kind: output, shape index: {}]
  %s4 = sld [smem:[#allocation0]]
  $region26: #{linear.1} parent=0
    _
  %s6 = ssub.s32 1, %s4
  %s7 = scalar_select 0, %s6, %s4
  $region1: #{linear.1} parent=0
    #allocation2 [shape = 'u8[8192]{0}', space=vmem, size = 0x2000, scoped, tag = 'input window, operand 1, single buffered']
    #allocation3 [shape = 's32[1]{0}', space=sflag, size = 0x4, scoped, tag = 'scoped memory for linear.1']
    #allocation4 [shape = 's32[1]{0}', space=sflag, size = 0x4, scoped, tag = 'scoped memory for linear.1']
    #allocation5 [shape = 'u8[1024]{0}', space=vmem, size = 0x400, scoped, tag = 'output window, operand 0, single buffered']
    %8 = vsyncpa [#allocation3], 0
    %9 = vsyncpa [#allocation4], 0
    // Predicated region
    $region2: #{linear.1} parent=1 // pred_check
      _
    $region3: #{linear.1} parent=1 // pred_check_branch
      %11 = sbr.rel (0) target = $region5
    $region4: #{linear.1} parent=1 // pred_region
      _
    $region5: #{linear.1} parent=1 // pred_fallthru
      _
    // Predicated region
    $region6: #{linear.1} parent=1 // pred_check
      _
    $region7: #{linear.1} parent=1 // pred_check_branch
      %13 = sbr.rel (0) target = $region9
    $region8: #{linear.1} parent=1 // pred_region
      %15 = vsyncadd [#allocation3], 0
      %s16 = sshll.u32 %s1, 4
      %s17 = int_to_ptr.hbm [resolvable:$true] %s16
      %s18 = sshll.u32 [#allocation2], 4
      %s19 = int_to_ptr.vmem [resolvable:$true] %s18
      %24 = dma.hbm_to_vmem [thread:$0]  %s17, 256, %s19, [#allocation3], 64, 64, 4
    $region9: #{linear.1} parent=1 // pred_fallthru
      _
    // Predicated region
    $region10: #{linear.1} parent=1 // pred_check
      _
    $region11: #{linear.1} parent=1 // pred_check_branch
      %26 = sbr.rel (0) target = $region13
    $region12: #{linear.1} parent=1 // pred_region
      _
    $region13: #{linear.1} parent=1 // pred_fallthru
      _
    // Predicated region
    $region14: #{linear.1} parent=1 // pred_check
      _
    $region15: #{linear.1} parent=1 // pred_check_branch
      %28 = sbr.rel (0) target = $region17
    $region16: #{linear.1} parent=1 // pred_region
      %30 = dma.done [#allocation3], 256
    $region17: #{linear.1} parent=1 // pred_fallthru
      _
    %v32 = vld [vmem:[%s0] sm:$0x1]
    %v33 = vld [vmem:[#allocation2] sm:$0xf]
    %v34 = vld [vmem:[#allocation2 + $0x4] sm:$0xf]
    %v35 = vld [vmem:[#allocation2 + $0x8] sm:$0xf]
    %v36 = vld [vmem:[#allocation2 + $0xc] sm:$0xf]
    %v37 = vld [vmem:[%s2] sm:$0x1]
    %v39 = vperm.slane %v37, 0
    %v45 = vunpack.c.l.b16 %v33
    %v46 = vunpack.c.l.b16 %v34
    %v47 = vunpack.c.l.b16 %v35
    %v48 = vunpack.c.l.b16 %v36
    %v49 = vpack.c.b16 %v46, %v45
    %v50 = vpack.c.b16 %v48, %v47
    %vm53 = vcmask 261120
    %v55 = vsel %vm53, %v32, 0
    %57 = vmatpush.bf16.msra.mxu0 0
    %58 = vmatpush.bf16.msra.mxu0 0
    %59 = vmatpush.bf16.msra.mxu0 0
    %60 = vmatpush.bf16.msra.mxu0 0
    %61 = vmatpush.bf16.msra.mxu0 0
    %62 = vmatpush.bf16.msra.mxu0 0
    %63 = vmatpush.bf16.msra.mxu0 %v50
    %64 = vmatpush.bf16.msra.mxu0 %v49
    %65 = vmatmul.bf16.gmra.mxu0 %v55
    %v66 = vpop.f32.mrf.mxu0
    %v67 = vadd.f32 %v39, %v66
    %v68 = vpop.f32.mrf.mxu0
    %69 = vdwg.mxu0
    %v70 = vxor.u32 %v67, 2147483648
    %v71 = vmul.f32 %v70, 1.442695
    %v72 = vpow.pop %v71
    %v73 = vadd.f32 %v72, 1.0
    %v74 = vrcp.pop %v73
    %v75 = vmul.f32 %v73, %v74
    %v76 = vsub.f32 1.0, %v75
    %v77 = vmul.f32 %v74, %v76
    %v78 = vadd.f32 %v74, %v77
    %vm79 = vweird.f32 %v73
    %vm80 = vweird.f32 %v74
    %vm81 = vmor %vm79, %vm80
    %v82 = vsel %vm81, %v74, %v78
    %v83 = vand.u32 2147483647, %v73
    %vm84 = vcmp.eq.f32.partialorder %v83, 8.507059e+37
    %v85 = vand.u32 %v73, 2147483648
    %v86 = vor.u32 1.1754944e-38, %v85
    %v87 = vsel %vm84, %v86, %v82
    %v88 = vmul.f32 1.0, %v87
    %v89 = vmul.f32 %v67, %v88
    %90 = vst [vmem:[#allocation5] sm:$0x3] %v89
    // Predicated region
    $region18: #{linear.1} parent=1 // pred_check
      _
    $region19: #{linear.1} parent=1 // pred_check_branch
      %92 = sbr.rel (0) target = $region21
    $region20: #{linear.1} parent=1 // pred_region
      %94 = vsyncadd [#allocation4], 0
      %s96 = sshll.u32 [#allocation5], 4
      %s97 = int_to_ptr.vmem [resolvable:$true] %s96
      %s98 = sshll.u32 %s3, 4
      %s99 = int_to_ptr.hbm [resolvable:$true] %s98
      %101 = dma.vmem_to_hbm [thread:$0]  %s97, 32, %s99, [#allocation4]
    $region21: #{linear.1} parent=1 // pred_fallthru
      _
    // Predicated region
    $region22: #{linear.1} parent=1 // pred_check
      _
    $region23: #{linear.1} parent=1 // pred_check_branch
      %103 = sbr.rel (0) target = $region25
    $region24: #{linear.1} parent=1 // pred_region
      %105 = dma.done [#allocation4], 32
    $region25: #{linear.1} parent=1 // pred_fallthru
      _
    %106 = vsyncpa [#allocation3], 1
    %107 = vsyncpa [#allocation4], 1

</llo_original>
